<compile_context>
chip_gen: v7x
topology: tpu7x:2x2x1
jax: 0.10.0
libtpu: 0.0.40
codegen_flags: <defaults>
</compile_context>

<pallas_src>
import jax
import jax.numpy as jnp
from jax.experimental import pallas as pl
from jax.experimental.pallas import tpu as pltpu


_SUBLANE_PACK = {4: 8, 2: 16, 1: 32}  # itemsize -> min sublane tile


def _round_up(x: int, m: int) -> int:
    return ((x + m - 1) // m) * m


def _make_eq_kernel(norm: int, sub_groups: int, tile_rows: int, lanes: int,
                    valid_rows):
    """Kernel factory.

    Each grid step handles one (tile_rows, lanes) block: writes value and
    penalty (input dtype) plus an (8, lanes) f32 partial-sum block.  If
    `valid_rows` is not None the slab has a ragged tail; rows >= valid_rows
    are masked out of the partial sum (their value/penalty writes are
    out-of-bounds and dropped by Pallas automatically).
    """

    def kernel(l_ref, r_ref, value_ref, penalty_ref, partial_ref):
        v = l_ref[...] - r_ref[...]          # value in input dtype (torch semantics)
        value_ref[...] = v
        v32 = v.astype(jnp.float32)
        p32 = jnp.abs(v32) if norm == 1 else v32 * v32
        penalty_ref[...] = p32.astype(penalty_ref.dtype)
        if valid_rows is not None:
            row0 = pl.program_id(0) * tile_rows
            gid = row0 + jax.lax.broadcasted_iota(jnp.int32, (tile_rows, lanes), 0)
            p32 = jnp.where(gid < valid_rows, p32, 0.0)
        # Groups of 8 consecutive rows are whole (8,128) vreg tiles, so this is
        # a straight VPU add chain (no per-step cross-lane XLU reduce).
        partial_ref[...] = jnp.sum(p32.reshape(sub_groups, 8, lanes), axis=0)[None]

    return kernel


def _eq_pallas_2d(l2, r2, *, norm: int, tile_rows_eff: int, lanes: int,
                  valid_rows, vmem_limit_bytes: int):
    """Run the streaming kernel on a (rows, lanes) slab."""
    rows2 = l2.shape[0]
    dtype = l2.dtype
    grid_n = pl.cdiv(rows2, tile_rows_eff)
    sub_groups = tile_rows_eff // 8

    tile_spec = pl.BlockSpec((tile_rows_eff, lanes), lambda i: (i, 0))
    partial_spec = pl.BlockSpec((1, 8, lanes), lambda i: (i, 0, 0))

    out_shapes = (
        jax.ShapeDtypeStruct((rows2, lanes), dtype),          # value
        jax.ShapeDtypeStruct((rows2, lanes), dtype),          # penalty
        jax.ShapeDtypeStruct((grid_n, 8, lanes), jnp.float32) # partial sums
    )

    return pl.pallas_call(
        _make_eq_kernel(norm, sub_groups, tile_rows_eff, lanes, valid_rows),
        out_shape=out_shapes,
        grid_spec=pltpu.PrefetchScalarGridSpec(
            num_scalar_prefetch=0,
            grid=(grid_n,),
            in_specs=[tile_spec, tile_spec],
            out_specs=[tile_spec, tile_spec, partial_spec],
        ),
        compiler_params=pltpu.CompilerParams(
            # Grid steps are fully independent -> megacore-shardable on v7x.
            dimension_semantics=("parallel",),
            vmem_limit_bytes=vmem_limit_bytes,
        ),
    )(l2, r2)


def eq_forward(left, right, *, norm: int = 1, tile_rows: int = 8192,
               lanes: int = 128, min_pallas_elements: int = 65536,
               vmem_limit_bytes: int = 48 * 1024 * 1024):
    """Pallas equivalent of Eq(norm).forward(left, right).

    Returns (loss, value, penalty); loss is a 0-d float32 array, value/penalty
    have the same shape/dtype as the inputs.
    """
    assert left.shape == right.shape and left.dtype == right.dtype
    assert norm in (1, 2)
    orig_shape = left.shape
    dtype = left.dtype

    total = 1
    for s in orig_shape:
        total *= int(s)

    def _penalty32(v32):
        return jnp.abs(v32) if norm == 1 else v32 * v32

    # ---- Small-input fast path: let XLA fuse everything (launch / reduce /
    # reshape overheads dominate a pallas_call at these sizes). -------------
    if total < min_pallas_elements:
        value = left - right
        p32 = _penalty32(value.astype(jnp.float32))
        penalty = p32.astype(dtype)
        loss = jnp.mean(p32)
        return loss, value, penalty

    pack = _SUBLANE_PACK.get(jnp.dtype(dtype).itemsize, 8)
    inv_total = jnp.float32(1.0 / total)

    if total % lanes == 0 and (total // lanes) >= pack:
        # ---- Zero-copy path (common case): view as (rows, 128), no pad, no
        # output slicing.  Ragged last grid block is masked in-kernel. -------
        rows = total // lanes
        tile_rows_eff = min(_round_up(tile_rows, pack), (rows // pack) * pack)
        ragged = (rows % tile_rows_eff) != 0
        valid_rows = rows if ragged else None

        l2 = left.reshape(rows, lanes)
        r2 = right.reshape(rows, lanes)
        value2, penalty2, partials = _eq_pallas_2d(
            l2, r2, norm=norm, tile_rows_eff=tile_rows_eff, lanes=lanes,
            valid_rows=valid_rows, vmem_limit_bytes=vmem_limit_bytes)

        loss = jnp.sum(partials) * inv_total
        value = value2.reshape(orig_shape)
        penalty = penalty2.reshape(orig_shape)
        return loss, value, penalty

    # ---- Rare fallback: total not a multiple of 128 (or too few rows).
    # Zero-pad the flat inputs (zeros contribute 0 to the sum, so the mean is
    # exact) and slice the outputs back.  This path pays extra HBM copies, so
    # it is only taken when the zero-copy layout is impossible. --------------
    rows = pl.cdiv(total, lanes)
    tile_rows_eff = max(pack, min(_round_up(tile_rows, pack), _round_up(rows, pack)))
    padded_rows = _round_up(rows, tile_rows_eff)
    pad = padded_rows * lanes - total
    lf = jnp.pad(left.reshape(-1), (0, pad))
    rf = jnp.pad(right.reshape(-1), (0, pad))
    value2, penalty2, partials = _eq_pallas_2d(
        lf.reshape(padded_rows, lanes), rf.reshape(padded_rows, lanes),
        norm=norm, tile_rows_eff=tile_rows_eff, lanes=lanes,
        valid_rows=None, vmem_limit_bytes=vmem_limit_bytes)

    loss = jnp.sum(partials) * inv_total
    value = value2.reshape(-1)[:total].reshape(orig_shape)
    penalty = penalty2.reshape(-1)[:total].reshape(orig_shape)
    return loss, value, penalty


if __name__ == "__main__":
    key = jax.random.PRNGKey(0)
    k1, k2, k3, k4 = jax.random.split(key, 4)

    # NCHW inputs, small shapes (2048 elements = 16 lane-dense rows).
    left = jax.random.normal(k1, (2, 4, 16, 16), dtype=jnp.float32)
    right = jax.random.normal(k2, (2, 4, 16, 16), dtype=jnp.float32)

    # 1) norm=1, Pallas path forced (shape is lane-aligned, single block).
    loss, value, penalty = eq_forward(left, right, norm=1, min_pallas_elements=0)
    jax.block_until_ready((loss, value, penalty))
    ref_value = left - right
    ref_penalty = jnp.abs(ref_value)
    ref_loss = jnp.mean(ref_penalty)
    assert value.shape == left.shape and penalty.shape == left.shape
    assert jnp.allclose(value, ref_value, atol=1e-6)
    assert jnp.allclose(penalty, ref_penalty, atol=1e-6)
    assert jnp.allclose(loss, ref_loss, atol=1e-6)

    # 2) norm=2, ragged-last-block path: 30 rows with 8-row tiles -> 4 grid
    #    steps, last block masked in-kernel (no pad / no output slice).
    left2 = jax.random.normal(k3, (3, 5, 16, 16), dtype=jnp.float32)
    right2 = jax.random.normal(k4, (3, 5, 16, 16), dtype=jnp.float32)
    loss2, value2, penalty2 = eq_forward(left2, right2, norm=2,
                                         min_pallas_elements=0, tile_rows=8)
    jax.block_until_ready((loss2, value2, penalty2))
    rv2 = left2 - right2
    assert jnp.allclose(value2, rv2, atol=1e-6)
    assert jnp.allclose(penalty2, rv2 ** 2, atol=1e-6)
    assert jnp.allclose(loss2, jnp.mean(rv2 ** 2), atol=1e-6)

    # 3) Default call on the small input takes the plain-JAX fast path.
    loss3, value3, penalty3 = eq_forward(left, right, norm=1)
    jax.block_until_ready((loss3, value3, penalty3))
    assert jnp.allclose(loss3, ref_loss, atol=1e-6)
    assert jnp.allclose(value3, ref_value, atol=1e-6)
    assert jnp.allclose(penalty3, ref_penalty, atol=1e-6)

    print("KERNEL_OK")
</pallas_src>

<mosaic_0001>
module attributes {stable_mosaic.version = 11 : i64} {
  func.func @kernel(%arg0: i32, %arg1: memref<16x128xf32, #tpu.memory_space<vmem>>, %arg2: memref<16x128xf32, #tpu.memory_space<vmem>>, %arg3: memref<16x128xf32, #tpu.memory_space<vmem>>, %arg4: memref<16x128xf32, #tpu.memory_space<vmem>>, %arg5: memref<1x8x128xf32, #tpu.memory_space<vmem>>) attributes {dimension_semantics = [#tpu.dimension_semantics<parallel>], iteration_bounds = array<i64: 1>, scalar_prefetch = 0 : i64, scratch_operands = 0 : i64, tpu.core_type = #tpu.core_type<tc>, window_params = [{transform_indices = @transform_0, window_bounds = array<i64: 16, 128>}, {transform_indices = @transform_1, window_bounds = array<i64: 16, 128>}, {transform_indices = @transform_2, window_bounds = array<i64: 16, 128>}, {transform_indices = @transform_3, window_bounds = array<i64: 16, 128>}, {transform_indices = @transform_4, window_bounds = array<i64: 1, 8, 128>}]} {
    %c0 = arith.constant 0 : index
    %c0_0 = arith.constant 0 : index
    %0 = vector.load %arg1[%c0, %c0_0] : memref<16x128xf32, #tpu.memory_space<vmem>>, vector<16x128xf32>
    %c0_1 = arith.constant 0 : index
    %c0_2 = arith.constant 0 : index
    %1 = vector.load %arg2[%c0_1, %c0_2] : memref<16x128xf32, #tpu.memory_space<vmem>>, vector<16x128xf32>
    %2 = arith.subf %0, %1 : vector<16x128xf32>
    %c0_3 = arith.constant 0 : index
    %c0_4 = arith.constant 0 : index
    %3 = vector.load %arg3[%c0_3, %c0_4] : memref<16x128xf32, #tpu.memory_space<vmem>>, vector<16x128xf32>
    tpu.vector_store %arg3[%c0_3, %c0_4], %2 {strides = array<i32>} : memref<16x128xf32, #tpu.memory_space<vmem>>, vector<16x128xf32>,
    %4 = math.absf %2 : vector<16x128xf32>
    %c0_5 = arith.constant 0 : index
    %c0_6 = arith.constant 0 : index
    %5 = vector.load %arg4[%c0_5, %c0_6] : memref<16x128xf32, #tpu.memory_space<vmem>>, vector<16x128xf32>
    tpu.vector_store %arg4[%c0_5, %c0_6], %4 {strides = array<i32>} : memref<16x128xf32, #tpu.memory_space<vmem>>, vector<16x128xf32>,
    %6 = vector.shape_cast %4 : vector<16x128xf32> to vector<2x8x128xf32>
    %cst = arith.constant dense<0.000000e+00> : vector<8x128xf32>
    %7 = vector.multi_reduction <add>, %6, %cst [0] : vector<2x8x128xf32> to vector<8x128xf32>
    %8 = vector.shape_cast %7 : vector<8x128xf32> to vector<1x8x128xf32>
    %c0_7 = arith.constant 0 : index
    %c0_8 = arith.constant 0 : index
    %c0_9 = arith.constant 0 : index
    %9 = vector.load %arg5[%c0_7, %c0_8, %c0_9] : memref<1x8x128xf32, #tpu.memory_space<vmem>>, vector<1x8x128xf32>
    tpu.vector_store %arg5[%c0_7, %c0_8, %c0_9], %8 {strides = array<i32>} : memref<1x8x128xf32, #tpu.memory_space<vmem>>, vector<1x8x128xf32>,
    return
  }
  func.func @transform_0(%arg0: i32) -> (i32, i32) {
    %c0_i32 = arith.constant 0 : i32
    %c0_i32_0 = arith.constant 0 : i32
    return %arg0, %c0_i32 : i32, i32
  }
  func.func @transform_1(%arg0: i32) -> (i32, i32) {
    %c0_i32 = arith.constant 0 : i32
    %c0_i32_0 = arith.constant 0 : i32
    return %arg0, %c0_i32 : i32, i32
  }
  func.func @transform_2(%arg0: i32) -> (i32, i32) {
    %c0_i32 = arith.constant 0 : i32
    %c0_i32_0 = arith.constant 0 : i32
    return %arg0, %c0_i32 : i32, i32
  }
  func.func @transform_3(%arg0: i32) -> (i32, i32) {
    %c0_i32 = arith.constant 0 : i32
    %c0_i32_0 = arith.constant 0 : i32
    return %arg0, %c0_i32 : i32, i32
  }
  func.func @transform_4(%arg0: i32) -> (i32, i32, i32) {
    %c0_i32 = arith.constant 0 : i32
    %c0_i32_0 = arith.constant 0 : i32
    %c0_i32_1 = arith.constant 0 : i32
    return %arg0, %c0_i32, %c0_i32_0 : i32, i32, i32
  }
}

</mosaic_0001>

<llo_original>
// kernel: tpu_custom_call.1
$region0: #{tpu_custom_call.1}
  #allocation0 [shape = 'u32[]', space=smem, size = 0x4, offset = 0x4, fixed_abs, tag = 'smem constant byte address 0x4 - core index']
  #allocation1 [shape = 'u32[144,128]{1,0:T(1,128)}', space=vmem, size = 0x12000, scoped, tag = 'internal scratch']
  %s0 = inlined_call_operand.hbm [shape: f32[16,128], index: 0, kind: input, shape index: {}]
  %s1 = inlined_call_operand.hbm [shape: f32[16,128], index: 1, kind: input, shape index: {}]
  %s2 = inlined_call_operand.hbm [shape: f32[16,128], index: 2, kind: output, shape index: {0}]
  %s3 = inlined_call_operand.hbm [shape: f32[16,128], index: 3, kind: output, shape index: {1}]
  %s4 = inlined_call_operand.hbm [shape: f32[1,8,128], index: 4, kind: output, shape index: {2}]
  %5 = xla_tuple %s2, %s3, %s4
  %s6 = sld [smem:[#allocation0]]
  $region42: #{tpu_custom_call.1} parent=0
    _
  %s8 = ssub.s32 1, %s6
  %s9 = scalar_select 0, %s8, %s6
  $region1: #{tpu_custom_call.1} parent=0
    #allocation2 [shape = 'u8[8192]{0}', space=vmem, size = 0x2000, scoped, tag = 'input window, operand 0, single buffered']
    #allocation3 [shape = 's32[1]{0}', space=sflag, size = 0x4, scoped, tag = 'scoped memory for tpu_custom_call.1']
    #allocation4 [shape = 's32[1]{0}', space=sflag, size = 0x4, scoped, tag = 'scoped memory for tpu_custom_call.1']
    #allocation5 [shape = 'u8[8192]{0}', space=vmem, size = 0x2000, scoped, tag = 'input window, operand 1, single buffered']
    #allocation6 [shape = 's32[1]{0}', space=sflag, size = 0x4, scoped, tag = 'scoped memory for tpu_custom_call.1']
    #allocation7 [shape = 'u8[8192]{0}', space=vmem, size = 0x2000, scoped, tag = 'output window, operand 0, single buffered']
    #allocation8 [shape = 'u8[8192]{0}', space=vmem, size = 0x2000, scoped, tag = 'output window, operand 1, single buffered']
    #allocation9 [shape = 's32[1]{0}', space=sflag, size = 0x4, scoped, tag = 'scoped memory for tpu_custom_call.1']
    #allocation10 [shape = 'u8[4096]{0}', space=vmem, size = 0x1000, scoped, tag = 'output window, operand 2, single buffered']
    %10 = vsyncpa [#allocation3], 0
    %11 = vsyncpa [#allocation6], 0
    %12 = vsyncpa [#allocation4], 0
    %13 = vsyncpa [#allocation9], 0
    // Predicated region
    $region2: #{tpu_custom_call.1} parent=1 // pred_check
      _
    $region3: #{tpu_custom_call.1} parent=1 // pred_check_branch
      %15 = sbr.rel (0) target = $region5
    $region4: #{tpu_custom_call.1} parent=1 // pred_region
      %s17 = ssub.s32 256, 256
      %18 = vsyncadd [#allocation3], %s17
      %s19 = sshll.u32 [#allocation2], 4
      %s20 = int_to_ptr.vmem [resolvable:$true] %s19
      %25 = dma.hbm_to_vmem [thread:$0]  %s0, 256, %s20, [#allocation3], 128, 128, 8
    $region5: #{tpu_custom_call.1} parent=1 // pred_fallthru
      _
    // Predicated region
    $region6: #{tpu_custom_call.1} parent=1 // pred_check
      _
    $region7: #{tpu_custom_call.1} parent=1 // pred_check_branch
      %27 = sbr.rel (0) target = $region9
    $region8: #{tpu_custom_call.1} parent=1 // pred_region
      %s29 = ssub.s32 256, 256
      %30 = vsyncadd [#allocation6], %s29
      %s31 = sshll.u32 [#allocation5], 4
      %s32 = int_to_ptr.vmem [resolvable:$true] %s31
      %37 = dma.hbm_to_vmem [thread:$0]  %s1, 256, %s32, [#allocation6], 128, 128, 8
    $region9: #{tpu_custom_call.1} parent=1 // pred_fallthru
      _
    // Predicated region
    $region10: #{tpu_custom_call.1} parent=1 // pred_check
      _
    $region11: #{tpu_custom_call.1} parent=1 // pred_check_branch
      %39 = sbr.rel (0) target = $region13
    $region12: #{tpu_custom_call.1} parent=1 // pred_region
      %40 = dma.done [#allocation3], 256
    $region13: #{tpu_custom_call.1} parent=1 // pred_fallthru
      _
    // Predicated region
    $region14: #{tpu_custom_call.1} parent=1 // pred_check
      _
    $region15: #{tpu_custom_call.1} parent=1 // pred_check_branch
      %42 = sbr.rel (0) target = $region17
    $region16: #{tpu_custom_call.1} parent=1 // pred_region
      %43 = dma.done [#allocation6], 256
    $region17: #{tpu_custom_call.1} parent=1 // pred_fallthru
      _
    %v44 = vld [vmem:[#allocation2] sm:$0xff]
    %v45 = vld [vmem:[#allocation2 + $0x8] sm:$0xff]
    %v46 = vld [vmem:[#allocation5] sm:$0xff]
    %v47 = vld [vmem:[#allocation5 + $0x8] sm:$0xff]
    %v48 = vsub.f32 %v44, %v46
    %v49 = vsub.f32 %v45, %v47
    %50 = vst [vmem:[#allocation7] sm:$0xff] %v48
    %51 = vst [vmem:[#allocation7 + $0x8] sm:$0xff] %v49
    %v52 = vand.u32 2147483647, %v48
    %v53 = vand.u32 2147483647, %v49
    %54 = vst [vmem:[#allocation8] sm:$0xff] %v52
    %55 = vst [vmem:[#allocation8 + $0x8] sm:$0xff] %v53
    %v56 = vadd.f32 %v52, %v53
    %57 = vst [vmem:[#allocation10] sm:$0xff] %v56
    // Predicated region
    $region18: #{tpu_custom_call.1} parent=1 // pred_check
      _
    $region19: #{tpu_custom_call.1} parent=1 // pred_check_branch
      %59 = sbr.rel (0) target = $region21
    $region20: #{tpu_custom_call.1} parent=1 // pred_region
      %s61 = ssub.s32 256, 256
      %62 = vsyncadd [#allocation4], %s61
      %s63 = sshll.u32 [#allocation7], 4
      %s64 = int_to_ptr.vmem [resolvable:$true] %s63
      %69 = dma.vmem_to_hbm [thread:$0]  %s64, 256, %s2, [#allocation4], 128, 128, 8
    $region21: #{tpu_custom_call.1} parent=1 // pred_fallthru
      _
    // Predicated region
    $region22: #{tpu_custom_call.1} parent=1 // pred_check
      _
    $region23: #{tpu_custom_call.1} parent=1 // pred_check_branch
      %71 = sbr.rel (0) target = $region25
    $region24: #{tpu_custom_call.1} parent=1 // pred_region
      %s73 = ssub.s32 256, 256
      %74 = vsyncadd [#allocation9], %s73
      %s75 = sshll.u32 [#allocation8], 4
      %s76 = int_to_ptr.vmem [resolvable:$true] %s75
      %81 = dma.vmem_to_hbm [thread:$0]  %s76, 256, %s3, [#allocation9], 128, 128, 8
    $region25: #{tpu_custom_call.1} parent=1 // pred_fallthru
      _
    // Predicated region
    $region26: #{tpu_custom_call.1} parent=1 // pred_check
      _
    $region27: #{tpu_custom_call.1} parent=1 // pred_check_branch
      %83 = sbr.rel (0) target = $region29
    $region28: #{tpu_custom_call.1} parent=1 // pred_region
      %s85 = ssub.s32 128, 128
      %86 = vsyncadd [#allocation9], %s85
      %s88 = sshll.u32 [#allocation10], 4
      %s89 = int_to_ptr.vmem [resolvable:$true] %s88
      %91 = dma.vmem_to_hbm [thread:$0]  %s89, 128, %s4, [#allocation9]
    $region29: #{tpu_custom_call.1} parent=1 // pred_fallthru
      _
    // Predicated region
    $region30: #{tpu_custom_call.1} parent=1 // pred_check
      _
    $region31: #{tpu_custom_call.1} parent=1 // pred_check_branch
      %93 = sbr.rel (0) target = $region33
    $region32: #{tpu_custom_call.1} parent=1 // pred_region
      %94 = dma.done [#allocation4], 256
    $region33: #{tpu_custom_call.1} parent=1 // pred_fallthru
      _
    // Predicated region
    $region34: #{tpu_custom_call.1} parent=1 // pred_check
      _
    $region35: #{tpu_custom_call.1} parent=1 // pred_check_branch
      %96 = sbr.rel (0) target = $region37
    $region36: #{tpu_custom_call.1} parent=1 // pred_region
      %97 = dma.done [#allocation9], 256
    $region37: #{tpu_custom_call.1} parent=1 // pred_fallthru
      _
    // Predicated region
    $region38: #{tpu_custom_call.1} parent=1 // pred_check
      _
    $region39: #{tpu_custom_call.1} parent=1 // pred_check_branch
      %99 = sbr.rel (0) target = $region41
    $region40: #{tpu_custom_call.1} parent=1 // pred_region
      %100 = dma.done [#allocation9], 128
    $region41: #{tpu_custom_call.1} parent=1 // pred_fallthru
      _
    %101 = vsyncpa [#allocation3], 1
    %102 = vsyncpa [#allocation6], 1
    %103 = vsyncpa [#allocation4], 1
    %104 = vsyncpa [#allocation9], 1

</llo_original>
